<compile_context>
chip_gen: v5e
topology: v5e:2x2
jax: 0.10.0
libtpu: 0.0.40
codegen_flags: <defaults>
</compile_context>

<pallas_src>
import functools

import jax
import jax.numpy as jnp
from jax import lax
from jax.experimental import pallas as pl
from jax.experimental.pallas import tpu as pltpu

LANE = 128


def _round_up(v, m):
    return (v + m - 1) // m * m


def _pick_rows_chunk(total_rows, k_pad, max_block_bytes=1 << 20, min_steps=4):
    """Largest spatial row chunk (bf16 block <= ~1 MiB) giving >= min_steps
    pipeline steps along the 'arbitrary' axis, sublane (8) aligned."""
    chunk = total_rows
    while (chunk % 2 == 0 and (chunk // 2) % 8 == 0 and
           (chunk * k_pad * 2 > max_block_bytes
            or total_rows // chunk < min_steps)):
        chunk //= 2
    return chunk


# ---------------------------------------------------------------------------
# Fused kernel: conv matmul (+bias, ReLU) -> segmented spatial sum (accum)
#               -> 1/(H*W) scale -> FC (+bias) -> + positions
# ---------------------------------------------------------------------------
def fused_patch_embed_kernel(patch_ref, wconv_ref, bconv_ref, wfc_ref,
                             bfc_ref, pos_ref, o_ref, psum_ref, *, hw):
    # patch_ref : (rows_chunk, K_pad)   bf16 lane-dense im2col rows
    # wconv_ref : (K_pad, COUT_pad)     bf16
    # bconv_ref : (1, COUT_pad)         f32
    # wfc_ref   : (COUT_pad, E_pad)     bf16
    # bfc_ref   : (1, E_pad)            f32
    # pos_ref   : (PN, E_pad)           f32 position embeddings for this block
    # o_ref     : (PN, E_pad)           f32 output block (lane dense)
    # psum_ref  : (PN, COUT_pad)        f32 pooled-sum accumulator (scratch)
    pn, _ = psum_ref.shape
    rows_chunk = patch_ref.shape[0]
    j = pl.program_id(1)                       # spatial ("arbitrary") axis

    @pl.when(j == 0)
    def _():
        psum_ref[...] = jnp.zeros_like(psum_ref)

    # ---- conv as matmul (bf16 operands, f32 accumulate) + bias + ReLU -----
    y = jnp.dot(patch_ref[...], wconv_ref[...],
                preferred_element_type=jnp.float32)        # (rows, COUT_pad)
    y = jnp.maximum(y + bconv_ref[...], 0.0)

    # ---- per-patch spatial sum as a tiny MXU matmul with an iota 0/1 mask --
    # row r of this chunk (global row j*rows_chunk + r) belongs to local patch
    # p iff p*hw <= row < (p+1)*hw.
    row0 = j * rows_chunk
    ridx = row0 + lax.broadcasted_iota(jnp.int32, (pn, rows_chunk), 1)
    lo = lax.broadcasted_iota(jnp.int32, (pn, rows_chunk), 0) * hw
    mask = ((ridx >= lo) & (ridx < lo + hw)).astype(jnp.bfloat16)   # exact 0/1
    psum_ref[...] += jnp.dot(mask, y.astype(jnp.bfloat16),
                             preferred_element_type=jnp.float32)

    # ---- finalize: mean scale, Linear(C_out -> E) + bias + positions -------
    @pl.when(j == pl.num_programs(1) - 1)
    def _():
        pooled = psum_ref[...] * (1.0 / hw)                # exact f32 scale
        proj = jnp.dot(pooled.astype(jnp.bfloat16), wfc_ref[...],
                       preferred_element_type=jnp.float32)
        o_ref[...] = (proj + bfc_ref[...] + pos_ref[...]).astype(o_ref.dtype)


# ---------------------------------------------------------------------------
# Wrapper
# ---------------------------------------------------------------------------
@functools.partial(jax.jit, static_argnames=("emb_size",))
def patch_embedding_forward(x, kparams, *, emb_size):
    """x: (B, N, C, H, W) -> (B, N, emb_size)."""
    b, n, c, h, w = x.shape
    bn = b * n
    hw = h * w

    wconv = kparams["w_conv_pad"]       # (K_pad, COUT_pad) bf16
    bconv = kparams["b_conv_pad"]       # (1, COUT_pad)     f32
    wfc = kparams["w_fc_pad"]           # (COUT_pad, E_pad) bf16
    bfc = kparams["b_fc_pad"]           # (1, E_pad)        f32
    pos = kparams["positions_pad"]      # (num_words, E_pad) f32

    k_pad, cout_pad = wconv.shape
    e_pad = wfc.shape[1]

    assert pos.shape[0] == n, "num_words must equal N (positions alignment)"
    assert n % 8 == 0, "num_words must be a multiple of 8 (output sublane tile)"
    # TODO(synk): pad the (b n) output rows instead of asserting if a
    # num_words that is not a multiple of 8 is ever needed.

    PN = 8                              # patches per output block (sublanes)
    n_patch_chunks = bn // PN
    n_pos_blocks = n // PN

    rows_per_chunk = PN * hw            # conv rows handled per patch-chunk
    rows_chunk = _pick_rows_chunk(rows_per_chunk, k_pad)
    num_row_chunks = rows_per_chunk // rows_chunk

    # ---- wrapper-side im2col: lane-dense (BN*H*W, K_pad) bf16 patch matrix --
    # Rearrange('b n c h w -> (b n) c h w'), channels-last, 'same' 3x3 halo.
    xf = x.reshape(bn, c, h, w).transpose(0, 2, 3, 1)       # (BN, H, W, C)
    xp = jnp.pad(xf, ((0, 0), (1, 1), (1, 1), (0, 0)))      # (BN, H+2, W+2, C)
    taps = [xp[:, dh:dh + h, dw:dw + w, :] for dh in range(3) for dw in range(3)]
    patch = jnp.concatenate(taps, axis=-1).reshape(bn * hw, 9 * c)
    patch = jnp.pad(patch, ((0, 0), (0, k_pad - 9 * c))).astype(jnp.bfloat16)

    kernel = functools.partial(fused_patch_embed_kernel, hw=hw)

    out = pl.pallas_call(
        kernel,
        out_shape=jax.ShapeDtypeStruct((bn, e_pad), jnp.float32),
        grid_spec=pltpu.PrefetchScalarGridSpec(
            num_scalar_prefetch=0,
            grid=(n_patch_chunks, num_row_chunks),          # (parallel, arbitrary)
            in_specs=[
                pl.BlockSpec((rows_chunk, k_pad),
                             lambda i, j: (i * num_row_chunks + j, 0)),
                pl.BlockSpec((k_pad, cout_pad), lambda i, j: (0, 0)),
                pl.BlockSpec((1, cout_pad), lambda i, j: (0, 0)),
                pl.BlockSpec((cout_pad, e_pad), lambda i, j: (0, 0)),
                pl.BlockSpec((1, e_pad), lambda i, j: (0, 0)),
                pl.BlockSpec((PN, e_pad), lambda i, j: (i % n_pos_blocks, 0)),
            ],
            out_specs=pl.BlockSpec((PN, e_pad), lambda i, j: (i, 0)),
            scratch_shapes=[pltpu.VMEM((PN, cout_pad), jnp.float32)],
        ),
        compiler_params=pltpu.CompilerParams(
            dimension_semantics=("parallel", "arbitrary"),
            vmem_limit_bytes=64 * 1024 * 1024,   # safe on v7x (64 MiB physical)
        ),
    )(patch, wconv, bconv, wfc, bfc, pos)

    # Rearrange('(b n) e -> b n e') and drop the lane padding of E.
    return out[:, :emb_size].reshape(b, n, emb_size)


# ---------------------------------------------------------------------------
# Parameters
# ---------------------------------------------------------------------------
def init_params(key, *, c_in, c_out, emb_size, num_words):
    ks = jax.random.split(key, 5)
    return dict(
        w_conv=0.1 * jax.random.normal(ks[0], (3, 3, c_in, c_out), jnp.float32),
        b_conv=0.1 * jax.random.normal(ks[1], (c_out,), jnp.float32),
        w_fc=0.1 * jax.random.normal(ks[2], (c_out, emb_size), jnp.float32),
        b_fc=0.1 * jax.random.normal(ks[3], (emb_size,), jnp.float32),
        positions=jax.random.normal(ks[4], (num_words, emb_size), jnp.float32),
    )


def pad_params_for_kernel(params):
    """Zero-pad all matmul dims to 128 lanes; bf16 MXU operands for weights."""
    w_conv = params["w_conv"]                       # (3, 3, C_in, C_out)
    kh, kw, c_in, c_out = w_conv.shape
    k = kh * kw * c_in
    k_pad = _round_up(k, LANE)
    cout_pad = _round_up(c_out, LANE)
    e = params["w_fc"].shape[1]
    e_pad = _round_up(e, LANE)

    w_conv_pad = (jnp.zeros((k_pad, cout_pad), jnp.float32)
                  .at[:k, :c_out].set(w_conv.reshape(k, c_out))
                  .astype(jnp.bfloat16))
    b_conv_pad = jnp.zeros((1, cout_pad), jnp.float32).at[0, :c_out].set(
        params["b_conv"])
    w_fc_pad = (jnp.zeros((cout_pad, e_pad), jnp.float32)
                .at[:c_out, :e].set(params["w_fc"]).astype(jnp.bfloat16))
    b_fc_pad = jnp.zeros((1, e_pad), jnp.float32).at[0, :e].set(params["b_fc"])
    positions_pad = jnp.zeros((params["positions"].shape[0], e_pad),
                              jnp.float32).at[:, :e].set(params["positions"])
    return dict(w_conv_pad=w_conv_pad, b_conv_pad=b_conv_pad,
                w_fc_pad=w_fc_pad, b_fc_pad=b_fc_pad,
                positions_pad=positions_pad)


# ---------------------------------------------------------------------------
# Pure-JAX reference (mirrors the kernel's bf16-operand / f32-accumulate math)
# ---------------------------------------------------------------------------
def reference_forward(x, params):
    b, n, c, h, w = x.shape
    bn = b * n
    xf = x.reshape(bn, c, h, w).transpose(0, 2, 3, 1)
    xp = jnp.pad(xf, ((0, 0), (1, 1), (1, 1), (0, 0)))
    taps = [xp[:, dh:dh + h, dw:dw + w, :] for dh in range(3) for dw in range(3)]
    patch = jnp.concatenate(taps, axis=-1).reshape(bn * h * w, 9 * c)
    patch = patch.astype(jnp.bfloat16)
    wc = params["w_conv"].reshape(9 * c, -1).astype(jnp.bfloat16)
    y = jnp.dot(patch, wc, preferred_element_type=jnp.float32)
    y = jnp.maximum(y + params["b_conv"][None, :], 0.0)
    y16 = y.astype(jnp.bfloat16).astype(jnp.float32)
    pooled = y16.reshape(bn, h * w, -1).sum(axis=1) * (1.0 / (h * w))
    wfc = params["w_fc"].astype(jnp.bfloat16).astype(jnp.float32)
    proj = (pooled.astype(jnp.bfloat16).astype(jnp.float32) @ wfc
            + params["b_fc"][None, :])
    return proj.reshape(b, n, -1) + params["positions"][None, :, :]


if __name__ == "__main__":
    B, N = 2, 8          # batch, num_words
    C, H, W = 4, 16, 16  # per-patch channels / spatial
    C_OUT = 16           # synthetic feature-extractor channels
    EMB = 32             # emb_size

    key = jax.random.PRNGKey(0)
    k_x, k_p = jax.random.split(key)
    x = jax.random.normal(k_x, (B, N, C, H, W), jnp.float32)
    params = init_params(k_p, c_in=C, c_out=C_OUT, emb_size=EMB, num_words=N)
    kparams = pad_params_for_kernel(params)

    out = patch_embedding_forward(x, kparams, emb_size=EMB)
    jax.block_until_ready(out)
    assert out.shape == (B, N, EMB), out.shape
    assert out.dtype == jnp.float32

    ref = reference_forward(x, params)
    err = float(jnp.max(jnp.abs(out - ref)))
    assert err < 5e-3, f"max abs err vs reference: {err}"

    print("KERNEL_OK")
</pallas_src>

<mosaic_0001>
module attributes {stable_mosaic.version = 11 : i64} {
  func.func @fused_patch_embed_kernel(%arg0: i32, %arg1: i32, %arg2: memref<512x128xbf16, #tpu.memory_space<vmem>>, %arg3: memref<128x128xbf16, #tpu.memory_space<vmem>>, %arg4: memref<1x128xf32, #tpu.memory_space<vmem>>, %arg5: memref<128x128xbf16, #tpu.memory_space<vmem>>, %arg6: memref<1x128xf32, #tpu.memory_space<vmem>>, %arg7: memref<8x128xf32, #tpu.memory_space<vmem>>, %arg8: memref<8x128xf32, #tpu.memory_space<vmem>>, %arg9: memref<8x128xf32, #tpu.memory_space<vmem>>) attributes {dimension_semantics = [#tpu.dimension_semantics<parallel>, #tpu.dimension_semantics<arbitrary>], iteration_bounds = array<i64: 2, 4>, scalar_prefetch = 0 : i64, scratch_operands = 1 : i64, tpu.core_type = #tpu.core_type<tc>, window_params = [{transform_indices = @transform_0, window_bounds = array<i64: 512, 128>}, {pipeline_mode = #tpu.pipeline_mode<synchronous>, transform_indices = @transform_1, window_bounds = array<i64: 128, 128>}, {pipeline_mode = #tpu.pipeline_mode<synchronous>, transform_indices = @transform_2, window_bounds = array<i64: 1, 128>}, {pipeline_mode = #tpu.pipeline_mode<synchronous>, transform_indices = @transform_3, window_bounds = array<i64: 128, 128>}, {pipeline_mode = #tpu.pipeline_mode<synchronous>, transform_indices = @transform_4, window_bounds = array<i64: 1, 128>}, {transform_indices = @transform_5, window_bounds = array<i64: 8, 128>}, {transform_indices = @transform_6, window_bounds = array<i64: 8, 128>}]} {
    %c0_i32 = arith.constant 0 : i32
    %0 = arith.cmpi eq, %arg1, %c0_i32 : i32
    %1 = arith.extui %0 : i1 to i32
    %c0_i32_0 = arith.constant 0 : i32
    %2 = arith.cmpi ne, %1, %c0_i32_0 : i32
    scf.if %2 {
      %cst_14 = arith.constant 0.000000e+00 : f32
      %34 = vector.broadcast %cst_14 : f32 to vector<8x128xf32>
      %c0_15 = arith.constant 0 : index
      %c0_16 = arith.constant 0 : index
      %35 = vector.load %arg9[%c0_15, %c0_16] : memref<8x128xf32, #tpu.memory_space<vmem>>, vector<8x128xf32>
      tpu.vector_store %arg9[%c0_15, %c0_16], %34 {strides = array<i32>} : memref<8x128xf32, #tpu.memory_space<vmem>>, vector<8x128xf32>,
    } else {
    }
    %c0 = arith.constant 0 : index
    %c0_1 = arith.constant 0 : index
    %3 = vector.load %arg2[%c0, %c0_1] : memref<512x128xbf16, #tpu.memory_space<vmem>>, vector<512x128xbf16>
    %c0_2 = arith.constant 0 : index
    %c0_3 = arith.constant 0 : index
    %4 = vector.load %arg3[%c0_2, %c0_3] : memref<128x128xbf16, #tpu.memory_space<vmem>>, vector<128x128xbf16>
    %cst = arith.constant dense<0.000000e+00> : vector<512x128xf32>
    %5 = tpu.matmul %3, %4, %cst {dimension_numbers = #tpu.dot_dimension_numbers<[1], [0], [0], [1], [0, 0, 1, 1], [], []>} : vector<512x128xbf16>, vector<128x128xbf16>, vector<512x128xf32> -> vector<512x128xf32>
    %c0_4 = arith.constant 0 : index
    %c0_5 = arith.constant 0 : index
    %6 = vector.load %arg4[%c0_4, %c0_5] : memref<1x128xf32, #tpu.memory_space<vmem>>, vector<1x128xf32>
    %7 = vector.broadcast %6 : vector<1x128xf32> to vector<512x128xf32>
    %8 = arith.addf %5, %7 : vector<512x128xf32>
    %cst_6 = arith.constant 0.000000e+00 : f32
    %9 = vector.broadcast %cst_6 : f32 to vector<512x128xf32>
    %10 = arith.maximumf %8, %9 : vector<512x128xf32>
    %c512_i32 = arith.constant 512 : i32
    %11 = arith.muli %arg1, %c512_i32 : i32
    %12 = tpu.iota {dimensions = array<i32: 1>} : vector<8x512xi32>
    %13 = vector.broadcast %11 : i32 to vector<8x512xi32>
    %14 = arith.addi %13, %12 : vector<8x512xi32>
    %15 = tpu.iota {dimensions = array<i32: 0>} : vector<8x512xi32>
    %c256_i32 = arith.constant 256 : i32
    %16 = vector.broadcast %c256_i32 : i32 to vector<8x512xi32>
    %17 = arith.muli %15, %16 : vector<8x512xi32>
    %18 = arith.cmpi sge, %14, %17 : vector<8x512xi32>
    %c256_i32_7 = arith.constant 256 : i32
    %19 = vector.broadcast %c256_i32_7 : i32 to vector<8x512xi32>
    %20 = arith.addi %17, %19 : vector<8x512xi32>
    %21 = arith.cmpi slt, %14, %20 : vector<8x512xi32>
    %22 = arith.andi %18, %21 : vector<8x512xi1>
    %23 = arith.extui %22 : vector<8x512xi1> to vector<8x512xi32>
    %24 = arith.sitofp %23 : vector<8x512xi32> to vector<8x512xf32>
    %25 = arith.truncf %24 : vector<8x512xf32> to vector<8x512xbf16>
    %c0_8 = arith.constant 0 : index
    %c0_9 = arith.constant 0 : index
    %26 = vector.load %arg9[%c0_8, %c0_9] : memref<8x128xf32, #tpu.memory_space<vmem>>, vector<8x128xf32>
    %27 = arith.truncf %10 : vector<512x128xf32> to vector<512x128xbf16>
    %cst_10 = arith.constant dense<0.000000e+00> : vector<8x128xf32>
    %28 = tpu.matmul %25, %27, %cst_10 {dimension_numbers = #tpu.dot_dimension_numbers<[1], [0], [0], [1], [0, 0, 1, 1], [], []>} : vector<8x512xbf16>, vector<512x128xbf16>, vector<8x128xf32> -> vector<8x128xf32>
    %29 = arith.addf %26, %28 : vector<8x128xf32>
    %c0_11 = arith.constant 0 : index
    %c0_12 = arith.constant 0 : index
    %30 = vector.load %arg9[%c0_11, %c0_12] : memref<8x128xf32, #tpu.memory_space<vmem>>, vector<8x128xf32>
    tpu.vector_store %arg9[%c0_11, %c0_12], %29 {strides = array<i32>} : memref<8x128xf32, #tpu.memory_space<vmem>>, vector<8x128xf32>,
    %c3_i32 = arith.constant 3 : i32
    %31 = arith.cmpi eq, %arg1, %c3_i32 : i32
    %32 = arith.extui %31 : i1 to i32
    %c0_i32_13 = arith.constant 0 : i32
    %33 = arith.cmpi ne, %32, %c0_i32_13 : i32
    scf.if %33 {
      %c0_14 = arith.constant 0 : index
      %c0_15 = arith.constant 0 : index
      %34 = vector.load %arg9[%c0_14, %c0_15] : memref<8x128xf32, #tpu.memory_space<vmem>>, vector<8x128xf32>
      %cst_16 = arith.constant 3.906250e-03 : f32
      %35 = vector.broadcast %cst_16 : f32 to vector<8x128xf32>
      %36 = arith.mulf %34, %35 : vector<8x128xf32>
      %37 = arith.truncf %36 : vector<8x128xf32> to vector<8x128xbf16>
      %c0_17 = arith.constant 0 : index
      %c0_18 = arith.constant 0 : index
      %38 = vector.load %arg5[%c0_17, %c0_18] : memref<128x128xbf16, #tpu.memory_space<vmem>>, vector<128x128xbf16>
      %cst_19 = arith.constant dense<0.000000e+00> : vector<8x128xf32>
      %39 = tpu.matmul %37, %38, %cst_19 {dimension_numbers = #tpu.dot_dimension_numbers<[1], [0], [0], [1], [0, 0, 1, 1], [], []>} : vector<8x128xbf16>, vector<128x128xbf16>, vector<8x128xf32> -> vector<8x128xf32>
      %c0_20 = arith.constant 0 : index
      %c0_21 = arith.constant 0 : index
      %40 = vector.load %arg6[%c0_20, %c0_21] : memref<1x128xf32, #tpu.memory_space<vmem>>, vector<1x128xf32>
      %41 = vector.broadcast %40 : vector<1x128xf32> to vector<8x128xf32>
      %42 = arith.addf %39, %41 : vector<8x128xf32>
      %c0_22 = arith.constant 0 : index
      %c0_23 = arith.constant 0 : index
      %43 = vector.load %arg7[%c0_22, %c0_23] : memref<8x128xf32, #tpu.memory_space<vmem>>, vector<8x128xf32>
      %44 = arith.addf %42, %43 : vector<8x128xf32>
      %c0_24 = arith.constant 0 : index
      %c0_25 = arith.constant 0 : index
      %45 = vector.load %arg8[%c0_24, %c0_25] : memref<8x128xf32, #tpu.memory_space<vmem>>, vector<8x128xf32>
      tpu.vector_store %arg8[%c0_24, %c0_25], %44 {strides = array<i32>} : memref<8x128xf32, #tpu.memory_space<vmem>>, vector<8x128xf32>,
    } else {
    }
    return
  }
  func.func @transform_0(%arg0: i32, %arg1: i32) -> (i32, i32) {
    %c4_i32 = arith.constant 4 : i32
    %0 = arith.muli %arg0, %c4_i32 : i32
    %1 = arith.addi %0, %arg1 : i32
    %c0_i32 = arith.constant 0 : i32
    %c0_i32_0 = arith.constant 0 : i32
    return %1, %c0_i32 : i32, i32
  }
  func.func @transform_1(%arg0: i32, %arg1: i32) -> (i32, i32) {
    %c0_i32 = arith.constant 0 : i32
    %c0_i32_0 = arith.constant 0 : i32
    %c0_i32_1 = arith.constant 0 : i32
    return %c0_i32, %c0_i32_0 : i32, i32
  }
  func.func @transform_2(%arg0: i32, %arg1: i32) -> (i32, i32) {
    %c0_i32 = arith.constant 0 : i32
    %c0_i32_0 = arith.constant 0 : i32
    %c0_i32_1 = arith.constant 0 : i32
    return %c0_i32, %c0_i32_0 : i32, i32
  }
  func.func @transform_3(%arg0: i32, %arg1: i32) -> (i32, i32) {
    %c0_i32 = arith.constant 0 : i32
    %c0_i32_0 = arith.constant 0 : i32
    %c0_i32_1 = arith.constant 0 : i32
    return %c0_i32, %c0_i32_0 : i32, i32
  }
  func.func @transform_4(%arg0: i32, %arg1: i32) -> (i32, i32) {
    %c0_i32 = arith.constant 0 : i32
    %c0_i32_0 = arith.constant 0 : i32
    %c0_i32_1 = arith.constant 0 : i32
    return %c0_i32, %c0_i32_0 : i32, i32
  }
  func.func @transform_5(%arg0: i32, %arg1: i32) -> (i32, i32) {
    %c1_i32 = arith.constant 1 : i32
    %c0_i32 = arith.constant 0 : i32
    %0 = arith.cmpi eq, %c1_i32, %c0_i32 : i32
    %c1_i32_0 = arith.constant 1 : i32
    %1 = arith.select %0, %c1_i32_0, %c1_i32 : i32
    %2 = arith.remsi %arg0, %1 : i32
    %c0_i32_1 = arith.constant 0 : i32
    %3 = arith.cmpi ne, %2, %c0_i32_1 : i32
    %c0_i32_2 = arith.constant 0 : i32
    %4 = arith.cmpi slt, %2, %c0_i32_2 : i32
    %c0_i32_3 = arith.constant 0 : i32
    %5 = arith.cmpi slt, %1, %c0_i32_3 : i32
    %6 = arith.xori %4, %5 : i1
    %7 = arith.andi %6, %3 : i1
    %8 = arith.addi %2, %1 : i32
    %9 = arith.select %7, %8, %2 : i32
    %c0_i32_4 = arith.constant 0 : i32
    %c0_i32_5 = arith.constant 0 : i32
    return %9, %c0_i32_4 : i32, i32
  }
  func.func @transform_6(%arg0: i32, %arg1: i32) -> (i32, i32) {
    %c0_i32 = arith.constant 0 : i32
    %c0_i32_0 = arith.constant 0 : i32
    return %arg0, %c0_i32 : i32, i32
  }
}

</mosaic_0001>

<llo_original>
// kernel: patch_embedding_forward.1
$region0: #{patch_embedding_forward.1}
  #allocation0 [shape = 'u32[]', space=smem, size = 0x4, offset = 0x4, fixed_abs, tag = 'smem constant byte address 0x4 - core index']
  #allocation1 [shape = 'u32[72,128]{1,0:T(1,128)}', space=vmem, size = 0x9000, scoped, tag = 'internal scratch']
  #allocation2 [shape = 'f32[8,128]{1,0:T(8,128)}', space=vmem, size = 0x1000, scoped, tag = 'scratch operand']
  %s0 = inlined_call_operand.vmem [shape: bf16[4096,128], index: 0, kind: input, shape index: {}]
  %s1 = inlined_call_operand.vmem [shape: bf16[128,128], index: 1, kind: input, shape index: {}]
  %s2 = inlined_call_operand.vmem [shape: f32[1,128], index: 2, kind: input, shape index: {}]
  %s3 = inlined_call_operand.vmem [shape: bf16[128,128], index: 3, kind: input, shape index: {}]
  %s4 = inlined_call_operand.vmem [shape: f32[1,128], index: 4, kind: input, shape index: {}]
  %s5 = inlined_call_operand.vmem [shape: f32[8,128], index: 5, kind: input, shape index: {}]
  %s6 = inlined_call_operand.vmem [shape: f32[16,128], index: 6, kind: output, shape index: {}]
  %s7 = sld [smem:[#allocation0]]
  $region65: #{patch_embedding_forward.1} parent=0
    _
  %s9 = ssub.s32 1, %s7
  %s10 = scalar_select 0, %s9, %s7
  loop: start=0, step=1, limit=10
  $region2: #{patch_embedding_forward.1} parent=0 // loop_pre_header
    _
  $region3: #{patch_embedding_forward.1} parent=0 // loop_header
    %s12 = sphi 0, %s16
    %p13 = scmp.ge.s32.totalorder %s12, 10
    %s19 = sphi 0, %s31
    %s20 = sphi 0, %s27
    %s21 = sphi 0, %s19
    %s22 = sphi 0, %s20
    %s23 = sphi 0, %s21
    %s24 = sphi 0, %s22
    %s38 = sphi 0, %s40
    %s41 = sphi 0, %s38
    %s42 = sphi 0, %s41
    %s58 = sphi 0, %s42
    %s62 = sphi 0, %s62
    %s64 = sphi 0, %s62
    %s65 = sphi 0, %s64
    %s79 = sphi 0, %s65
    %s83 = sphi 0, %s83
    %s85 = sphi 0, %s83
    %s86 = sphi 0, %s85
    %s100 = sphi 0, %s86
    %s104 = sphi 0, %s104
    %s106 = sphi 0, %s104
    %s107 = sphi 0, %s106
    %s121 = sphi 0, %s107
    %s125 = sphi 0, %s125
    %s127 = sphi 0, %s125
    %s128 = sphi 0, %s127
    %s142 = sphi 0, %s128
    %s146 = sphi 0, %s146
    %s148 = sphi 0, %s146
    %s149 = sphi 0, %s148
    %s163 = sphi 0, %s149
    %s169 = sphi 0, %s171
    %s172 = sphi 0, %s169
    %s173 = sphi 0, %s172
    %s189 = sphi 0, %s173
  $region4: #{patch_embedding_forward.1} parent=0 // loop_header_branch
    %15 = sbr.rel (%p13) target = $region8
  $region5: #{patch_embedding_forward.1} parent=0 // loop_body
    %s17 = ssub.s32 %s12, 1
    %s18 = ssub.s32 %s12, 2
    %s25 = sadd.s32 1, %s20
    %p26 = scmp.ge.s32.totalorder %s25, 4
    %s27 = scalar_select %p26, 0, %s25
    %s28 = sadd.s32 1, %s19
    %s29 = scalar_select %p26, %s28, %s19
    %p30 = scmp.ge.s32.totalorder %s29, 2
    %s31 = scalar_select %p30, 0, %s29
    %s32 = smul.u32 %s19, 4
    %s33 = sadd.s32 %s32, %s20
    %s34 = smul.u32 %s31, 4
    %s35 = sadd.s32 %s34, %s27
    %s36 = ssub.s32 %s33, %s35
    %p37 = scmp.eq.s32.totalorder %s36, 0
    %s39 = sadd.s32 %s38, 1
    %s40 = scalar_select %p37, %s38, %s39
    %p43 = pneg %p37
    %p44 = scmp.eq.s32.totalorder %s12, 7
    %p45 = por %p43, %p44
    %p46 = scmp.ne.s32.totalorder %s38, %s41
    %p47 = scmp.eq.s32.totalorder %s12, 0
    %p48 = por %p46, %p47
    %p49 = scmp.ne.s32.totalorder %s38, %s41
    %p50 = scmp.eq.s32.totalorder %s17, 7
    %p51 = por %p49, %p50
    %p52 = scmp.ne.s32.totalorder %s41, %s42
    %p53 = scmp.eq.s32.totalorder %s17, 0
    %p54 = por %p52, %p53
    %p55 = scmp.ne.s32.totalorder %s41, %s42
    %p56 = scmp.eq.s32.totalorder %s18, 7
    %p57 = por %p55, %p56
    %p59 = scmp.ne.s32.totalorder %s42, %s58
    %p60 = scmp.eq.s32.totalorder %s18, 0
    %p61 = por %p59, %p60
    %s63 = sadd.s32 %s62, 1
    %p66 = scmp.eq.s32.totalorder %s12, 7
    %p67 = scmp.ne.s32.totalorder %s62, %s64
    %p68 = scmp.eq.s32.totalorder %s12, 0
    %p69 = por %p67, %p68
    %p70 = scmp.ne.s32.totalorder %s62, %s64
    %p71 = scmp.eq.s32.totalorder %s17, 7
    %p72 = por %p70, %p71
    %p73 = scmp.ne.s32.totalorder %s64, %s65
    %p74 = scmp.eq.s32.totalorder %s17, 0
    %p75 = por %p73, %p74
    %p76 = scmp.ne.s32.totalorder %s64, %s65
    %p77 = scmp.eq.s32.totalorder %s18, 7
    %p78 = por %p76, %p77
    %p80 = scmp.ne.s32.totalorder %s65, %s79
    %p81 = scmp.eq.s32.totalorder %s18, 0
    %p82 = por %p80, %p81
    %s84 = sadd.s32 %s83, 1
    %p87 = scmp.eq.s32.totalorder %s12, 7
    %p88 = scmp.ne.s32.totalorder %s83, %s85
    %p89 = scmp.eq.s32.totalorder %s12, 0
    %p90 = por %p88, %p89
    %p91 = scmp.ne.s32.totalorder %s83, %s85
    %p92 = scmp.eq.s32.totalorder %s17, 7
    %p93 = por %p91, %p92
    %p94 = scmp.ne.s32.totalorder %s85, %s86
    %p95 = scmp.eq.s32.totalorder %s17, 0
    %p96 = por %p94, %p95
    %p97 = scmp.ne.s32.totalorder %s85, %s86
    %p98 = scmp.eq.s32.totalorder %s18, 7
    %p99 = por %p97, %p98
    %p101 = scmp.ne.s32.totalorder %s86, %s100
    %p102 = scmp.eq.s32.totalorder %s18, 0
    %p103 = por %p101, %p102
    %s105 = sadd.s32 %s104, 1
    %p108 = scmp.eq.s32.totalorder %s12, 7
    %p109 = scmp.ne.s32.totalorder %s104, %s106
    %p110 = scmp.eq.s32.totalorder %s12, 0
    %p111 = por %p109, %p110
    %p112 = scmp.ne.s32.totalorder %s104, %s106
    %p113 = scmp.eq.s32.totalorder %s17, 7
    %p114 = por %p112, %p113
    %p115 = scmp.ne.s32.totalorder %s106, %s107
    %p116 = scmp.eq.s32.totalorder %s17, 0
    %p117 = por %p115, %p116
    %p118 = scmp.ne.s32.totalorder %s106, %s107
    %p119 = scmp.eq.s32.totalorder %s18, 7
    %p120 = por %p118, %p119
    %p122 = scmp.ne.s32.totalorder %s107, %s121
    %p123 = scmp.eq.s32.totalorder %s18, 0
    %p124 = por %p122, %p123
    %s126 = sadd.s32 %s125, 1
    %p129 = scmp.eq.s32.totalorder %s12, 7
    %p130 = scmp.ne.s32.totalorder %s125, %s127
    %p131 = scmp.eq.s32.totalorder %s12, 0
    %p132 = por %p130, %p131
    %p133 = scmp.ne.s32.totalorder %s125, %s127
    %p134 = scmp.eq.s32.totalorder %s17, 7
    %p135 = por %p133, %p134
    %p136 = scmp.ne.s32.totalorder %s127, %s128
    %p137 = scmp.eq.s32.totalorder %s17, 0
    %p138 = por %p136, %p137
    %p139 = scmp.ne.s32.totalorder %s127, %s128
    %p140 = scmp.eq.s32.totalorder %s18, 7
    %p141 = por %p139, %p140
    %p143 = scmp.ne.s32.totalorder %s128, %s142
    %p144 = scmp.eq.s32.totalorder %s18, 0
    %p145 = por %p143, %p144
    %s147 = sadd.s32 %s146, 1
    %p150 = scmp.eq.s32.totalorder %s12, 7
    %p151 = scmp.ne.s32.totalorder %s146, %s148
    %p152 = scmp.eq.s32.totalorder %s12, 0
    %p153 = por %p151, %p152
    %p154 = scmp.ne.s32.totalorder %s146, %s148
    %p155 = scmp.eq.s32.totalorder %s17, 7
    %p156 = por %p154, %p155
    %p157 = scmp.ne.s32.totalorder %s148, %s149
    %p158 = scmp.eq.s32.totalorder %s17, 0
    %p159 = por %p157, %p158
    %p160 = scmp.ne.s32.totalorder %s148, %s149
    %p161 = scmp.eq.s32.totalorder %s18, 7
    %p162 = por %p160, %p161
    %p164 = scmp.ne.s32.totalorder %s149, %s163
    %p165 = scmp.eq.s32.totalorder %s18, 0
    %p166 = por %p164, %p165
    %s167 = ssub.s32 %s19, %s31
    %p168 = scmp.eq.s32.totalorder %s167, 0
    %s170 = sadd.s32 %s169, 1
    %s171 = scalar_select %p168, %s169, %s170
    %p174 = pneg %p168
    %p175 = scmp.eq.s32.totalorder %s12, 7
    %p176 = por %p174, %p175
    %p177 = scmp.ne.s32.totalorder %s169, %s172
    %p178 = scmp.eq.s32.totalorder %s12, 0
    %p179 = por %p177, %p178
    %p180 = scmp.ne.s32.totalorder %s169, %s172
    %p181 = scmp.eq.s32.totalorder %s17, 7
    %p182 = por %p180, %p181
    %p183 = scmp.ne.s32.totalorder %s172, %s173
    %p184 = scmp.eq.s32.totalorder %s17, 0
    %p185 = por %p183, %p184
    %p186 = scmp.ne.s32.totalorder %s172, %s173
    %p187 = scmp.eq.s32.totalorder %s18, 7
    %p188 = por %p186, %p187
    %p190 = scmp.ne.s32.totalorder %s173, %s189
    %p191 = scmp.eq.s32.totalorder %s18, 0
    %p192 = por %p190, %p191
    %p193 = scmp.le.s32.totalorder 1, %s12
    %p194 = scmp.lt.s32.totalorder %s12, 9
    %p195 = pnand %p193, %p194
    %p196 = pneg %p195
    // Predicated region
    $region9: #{patch_embedding_forward.1} parent=5 // pred_check
      _
    $region10: #{patch_embedding_forward.1} parent=5 // pred_check_branch
      %198 = sbr.rel (%p195) target = $region12
    $region11: #{patch_embedding_forward.1} parent=5 // pred_region
      %s199 = ssub.s32 %s12, 1
      // Predicated region
      $region13: #{patch_embedding_forward.1} parent=11 // pred_check
        %p200 = pneg %p75
      $region14: #{patch_embedding_forward.1} parent=11 // pred_check_branch
        %202 = sbr.rel (%p200) target = $region16
      $region15: #{patch_embedding_forward.1} parent=11 // pred_region
        _
      $region16: #{patch_embedding_forward.1} parent=11 // pred_fallthru
        _
      // Predicated region
      $region17: #{patch_embedding_forward.1} parent=11 // pred_check
        %p203 = pneg %p96
      $region18: #{patch_embedding_forward.1} parent=11 // pred_check_branch
        %205 = sbr.rel (%p203) target = $region20
      $region19: #{patch_embedding_forward.1} parent=11 // pred_region
        _
      $region20: #{patch_embedding_forward.1} parent=11 // pred_fallthru
        _
      // Predicated region
      $region21: #{patch_embedding_forward.1} parent=11 // pred_check
        %p206 = pneg %p117
      $region22: #{patch_embedding_forward.1} parent=11 // pred_check_branch
        %208 = sbr.rel (%p206) target = $region24
      $region23: #{patch_embedding_forward.1} parent=11 // pred_region
        _
      $region24: #{patch_embedding_forward.1} parent=11 // pred_fallthru
        _
      // Predicated region
      $region25: #{patch_embedding_forward.1} parent=11 // pred_check
        %p209 = pneg %p138
      $region26: #{patch_embedding_forward.1} parent=11 // pred_check_branch
        %211 = sbr.rel (%p209) target = $region28
      $region27: #{patch_embedding_forward.1} parent=11 // pred_region
        _
      $region28: #{patch_embedding_forward.1} parent=11 // pred_fallthru
        _
      // Predicated region
      $region29: #{patch_embedding_forward.1} parent=11 // pred_check
        %p212 = pneg %p159
      $region30: #{patch_embedding_forward.1} parent=11 // pred_check_branch
        %214 = sbr.rel (%p212) target = $region32
      $region31: #{patch_embedding_forward.1} parent=11 // pred_region
        _
      $region32: #{patch_embedding_forward.1} parent=11 // pred_fallthru
        _
    $region12: #{patch_embedding_forward.1} parent=5 // pred_fallthru
      _
    %p215 = scmp.lt.s32.totalorder %s12, 8
    // Predicated region
    $region33: #{patch_embedding_forward.1} parent=5 // pred_check
      %p216 = pneg %p215
    $region34: #{patch_embedding_forward.1} parent=5 // pred_check_branch
      %218 = sbr.rel (%p216) target = $region36
    $region35: #{patch_embedding_forward.1} parent=5 // pred_region
      // Predicated region
      $region37: #{patch_embedding_forward.1} parent=35 // pred_check
        %p219 = pneg %p48
      $region38: #{patch_embedding_forward.1} parent=35 // pred_check_branch
        %221 = sbr.rel (%p219) target = $region40
      $region39: #{patch_embedding_forward.1} parent=35 // pred_region
        %s222 = smul.u32 %s19, 4
        %s223 = sadd.s32 %s222, %s20
        %s224 = smul.u32 64, %s223
        %p225 = scmp.lt.s32.totalorder %s224, 511
        %s226 = scalar_select %p225, %s224, 511
        %s227 = smul.addr %s226, 4
        %s228 = scalar_lea.vmem %s0, %s227
        %s229 = smul.u32 %s19, 4
        %s230 = sadd.s32 %s229, %s20
        %s231 = smul.u32 64, %s230
      $region40: #{patch_embedding_forward.1} parent=35 // pred_fallthru
        _
    $region36: #{patch_embedding_forward.1} parent=5 // pred_fallthru
      _
    %p232 = scmp.le.s32.totalorder 1, %s12
    %p233 = scmp.lt.s32.totalorder %s12, 9
    %p234 = pnand %p232, %p233
    %p235 = pneg %p234
    // Predicated region
    $region41: #{patch_embedding_forward.1} parent=5 // pred_check
      _
    $region42: #{patch_embedding_forward.1} parent=5 // pred_check_branch
      %237 = sbr.rel (%p234) target = $region44
    $region43: #{patch_embedding_forward.1} parent=5 // pred_region
      %s238 = ssub.s32 %s12, 1
      %s239 = smul.u32 %s21, 4
      %s240 = sadd.s32 %s239, %s22
      %s241 = smul.u32 64, %s240
      %p242 = scmp.lt.s32.totalorder %s241, 511
      %s243 = scalar_select %p242, %s241, 511
      %s244 = smul.addr %s243, 4
      %s245 = scalar_lea.vmem %s0, %s244
      %p246 = pneg %p54
      %p247 = pneg %p51
      %p248 = pneg %p75
      %p249 = pneg %p72
      %p250 = pneg %p96
      %p251 = pneg %p93
      %p252 = pneg %p117
      %p253 = pneg %p114
      %p254 = pneg %p138
      %p255 = pneg %p135
      %p256 = pneg %p159
      %p257 = pneg %p156
      %p258 = pneg %p185
      %p259 = pneg %p182
      %p260 = scmp.lt.s32.totalorder %s21, 1
      %s261 = scalar_select %p260, %s21, 1
      %s262 = smul.addr %s261, 8
      %s263 = scalar_lea.vmem %s6, %s262
      %s264 = smul.u32 %s21, 4
      %s265 = sadd.s32 %s264, %s22
      %s266 = smul.u32 64, %s265
      %p267 = scmp.lt.s32.totalorder %s266, 511
      %s268 = scalar_select %p267, %s266, 511
      %s269 = smul.addr %s268, 4
      %s270 = scalar_lea.vmem %s0, %s269
      %s271 = smul.u32 %s21, 4
      %s272 = sadd.s32 %s271, %s22
      %s273 = smul.u32 64, %s272
      %p274 = scmp.lt.s32.totalorder %s21, 1
      %s275 = scalar_select %p274, %s21, 1
      %s276 = smul.addr %s275, 8
      %s277 = scalar_lea.vmem %s6, %s276
      %p278 = scmp.eq.s32.totalorder %s22, 0
      // Predicated region
      $region45: #{patch_embedding_forward.1} parent=43 // pred_check
        %p279 = pneg %p278
      $region46: #{patch_embedding_forward.1} parent=43 // pred_check_branch
        %281 = sbr.rel (%p279) target = $region48
      $region47: #{patch_embedding_forward.1} parent=43 // pred_region
        %282 = vst [vmem:[#allocation2] sm:$0xff] 0.0
      $region48: #{patch_embedding_forward.1} parent=43 // pred_fallthru
        _
      %v283 = vld [vmem:[%s270] sm:$0xf]
      %v284 = vld [vmem:[%s270 + $0x4] sm:$0xf]
      %v285 = vld [vmem:[%s270 + $0x8] sm:$0xf]
      %v286 = vld [vmem:[%s270 + $0xc] sm:$0xf]
      %v287 = vld [vmem:[%s270 + $0x10] sm:$0xf]
      %v288 = vld [vmem:[%s270 + $0x14] sm:$0xf]
      %v289 = vld [vmem:[%s270 + $0x18] sm:$0xf]
      %v290 = vld [vmem:[%s270 + $0x1c] sm:$0xf]
      %v291 = vld [vmem:[%s270 + $0x20] sm:$0xf]
      %v292 = vld [vmem:[%s270 + $0x24] sm:$0xf]
      %v293 = vld [vmem:[%s270 + $0x28] sm:$0xf]
      %v294 = vld [vmem:[%s270 + $0x2c] sm:$0xf]
      %v295 = vld [vmem:[%s270 + $0x30] sm:$0xf]
      %v296 = vld [vmem:[%s270 + $0x34] sm:$0xf]
      %v297 = vld [vmem:[%s270 + $0x38] sm:$0xf]
      %v298 = vld [vmem:[%s270 + $0x3c] sm:$0xf]
      %v299 = vld [vmem:[%s270 + $0x40] sm:$0xf]
      %v300 = vld [vmem:[%s270 + $0x44] sm:$0xf]
      %v301 = vld [vmem:[%s270 + $0x48] sm:$0xf]
      %v302 = vld [vmem:[%s270 + $0x4c] sm:$0xf]
      %v303 = vld [vmem:[%s270 + $0x50] sm:$0xf]
      %v304 = vld [vmem:[%s270 + $0x54] sm:$0xf]
      %v305 = vld [vmem:[%s270 + $0x58] sm:$0xf]
      %v306 = vld [vmem:[%s270 + $0x5c] sm:$0xf]
      %v307 = vld [vmem:[%s270 + $0x60] sm:$0xf]
      %v308 = vld [vmem:[%s270 + $0x64] sm:$0xf]
      %v309 = vld [vmem:[%s270 + $0x68] sm:$0xf]
      %v310 = vld [vmem:[%s270 + $0x6c] sm:$0xf]
      %v311 = vld [vmem:[%s270 + $0x70] sm:$0xf]
      %v312 = vld [vmem:[%s270 + $0x74] sm:$0xf]
      %v313 = vld [vmem:[%s270 + $0x78] sm:$0xf]
      %v314 = vld [vmem:[%s270 + $0x7c] sm:$0xf]
      %v315 = vld [vmem:[%s270 + $0x80] sm:$0xf]
      %v316 = vld [vmem:[%s270 + $0x84] sm:$0xf]
      %v317 = vld [vmem:[%s270 + $0x88] sm:$0xf]
      %v318 = vld [vmem:[%s270 + $0x8c] sm:$0xf]
      %v319 = vld [vmem:[%s270 + $0x90] sm:$0xf]
      %v320 = vld [vmem:[%s270 + $0x94] sm:$0xf]
      %v321 = vld [vmem:[%s270 + $0x98] sm:$0xf]
      %v322 = vld [vmem:[%s270 + $0x9c] sm:$0xf]
      %v323 = vld [vmem:[%s270 + $0xa0] sm:$0xf]
      %v324 = vld [vmem:[%s270 + $0xa4] sm:$0xf]
      %v325 = vld [vmem:[%s270 + $0xa8] sm:$0xf]
      %v326 = vld [vmem:[%s270 + $0xac] sm:$0xf]
      %v327 = vld [vmem:[%s270 + $0xb0] sm:$0xf]
      %v328 = vld [vmem:[%s270 + $0xb4] sm:$0xf]
      %v329 = vld [vmem:[%s270 + $0xb8] sm:$0xf]
      %v330 = vld [vmem:[%s270 + $0xbc] sm:$0xf]
      %v331 = vld [vmem:[%s270 + $0xc0] sm:$0xf]
      %v332 = vld [vmem:[%s270 + $0xc4] sm:$0xf]
      %v333 = vld [vmem:[%s270 + $0xc8] sm:$0xf]
      %v334 = vld [vmem:[%s270 + $0xcc] sm:$0xf]
      %v335 = vld [vmem:[%s270 + $0xd0] sm:$0xf]
      %v336 = vld [vmem:[%s270 + $0xd4] sm:$0xf]
      %v337 = vld [vmem:[%s270 + $0xd8] sm:$0xf]
      %v338 = vld [vmem:[%s270 + $0xdc] sm:$0xf]
      %v339 = vld [vmem:[%s270 + $0xe0] sm:$0xf]
      %v340 = vld [vmem:[%s270 + $0xe4] sm:$0xf]
      %v341 = vld [vmem:[%s270 + $0xe8] sm:$0xf]
      %v342 = vld [vmem:[%s270 + $0xec] sm:$0xf]
      %v343 = vld [vmem:[%s270 + $0xf0] sm:$0xf]
      %v344 = vld [vmem:[%s270 + $0xf4] sm:$0xf]
      %v345 = vld [vmem:[%s270 + $0xf8] sm:$0xf]
      %v346 = vld [vmem:[%s270 + $0xfc] sm:$0xf]
      %v347 = vld [vmem:[%s1] sm:$0xf]
      %v348 = vld [vmem:[%s1 + $0x4] sm:$0xf]
      %v349 = vld [vmem:[%s1 + $0x8] sm:$0xf]
      %v350 = vld [vmem:[%s1 + $0xc] sm:$0xf]
      %v351 = vld [vmem:[%s1 + $0x10] sm:$0xf]
      %v352 = vld [vmem:[%s1 + $0x14] sm:$0xf]
      %v353 = vld [vmem:[%s1 + $0x18] sm:$0xf]
      %v354 = vld [vmem:[%s1 + $0x1c] sm:$0xf]
      %v355 = vld [vmem:[%s1 + $0x20] sm:$0xf]
      %v356 = vld [vmem:[%s1 + $0x24] sm:$0xf]
      %v357 = vld [vmem:[%s1 + $0x28] sm:$0xf]
      %v358 = vld [vmem:[%s1 + $0x2c] sm:$0xf]
      %v359 = vld [vmem:[%s1 + $0x30] sm:$0xf]
      %v360 = vld [vmem:[%s1 + $0x34] sm:$0xf]
      %v361 = vld [vmem:[%s1 + $0x38] sm:$0xf]
      %v362 = vld [vmem:[%s1 + $0x3c] sm:$0xf]
      %v363 = vld [vmem:[%s2] sm:$0x1]
      %v365 = vperm.slane %v363, 0
      %v431 = vunpack.c.l.b16 %v283
      %v432 = vunpack.c.l.b16 %v284
      %v433 = vunpack.c.l.b16 %v285
      %v434 = vunpack.c.l.b16 %v286
      %v435 = vunpack.c.l.b16 %v287
      %v436 = vunpack.c.l.b16 %v288
      %v437 = vunpack.c.l.b16 %v289
      %v438 = vunpack.c.l.b16 %v290
      %v439 = vunpack.c.l.b16 %v291
      %v440 = vunpack.c.l.b16 %v292
      %v441 = vunpack.c.l.b16 %v293
      %v442 = vunpack.c.l.b16 %v294
      %v443 = vunpack.c.l.b16 %v295
      %v444 = vunpack.c.l.b16 %v296
      %v445 = vunpack.c.l.b16 %v297
      %v446 = vunpack.c.l.b16 %v298
      %v447 = vunpack.c.l.b16 %v299
      %v448 = vunpack.c.l.b16 %v300
      %v449 = vunpack.c.l.b16 %v301
      %v450 = vunpack.c.l.b16 %v302
      %v451 = vunpack.c.l.b16 %v303
      %v452 = vunpack.c.l.b16 %v304
      %v453 = vunpack.c.l.b16 %v305
      %v454 = vunpack.c.l.b16 %v306
      %v455 = vunpack.c.l.b16 %v307
      %v456 = vunpack.c.l.b16 %v308
      %v457 = vunpack.c.l.b16 %v309
      %v458 = vunpack.c.l.b16 %v310
      %v459 = vunpack.c.l.b16 %v311
      %v460 = vunpack.c.l.b16 %v312
      %v461 = vunpack.c.l.b16 %v313
      %v462 = vunpack.c.l.b16 %v314
      %v463 = vunpack.c.l.b16 %v315
      %v464 = vunpack.c.l.b16 %v316
      %v465 = vunpack.c.l.b16 %v317
      %v466 = vunpack.c.l.b16 %v318
      %v467 = vunpack.c.l.b16 %v319
      %v468 = vunpack.c.l.b16 %v320
      %v469 = vunpack.c.l.b16 %v321
      %v470 = vunpack.c.l.b16 %v322
      %v471 = vunpack.c.l.b16 %v323
      %v472 = vunpack.c.l.b16 %v324
      %v473 = vunpack.c.l.b16 %v325
      %v474 = vunpack.c.l.b16 %v326
      %v475 = vunpack.c.l.b16 %v327
      %v476 = vunpack.c.l.b16 %v328
      %v477 = vunpack.c.l.b16 %v329
      %v478 = vunpack.c.l.b16 %v330
      %v479 = vunpack.c.l.b16 %v331
      %v480 = vunpack.c.l.b16 %v332
      %v481 = vunpack.c.l.b16 %v333
      %v482 = vunpack.c.l.b16 %v334
      %v483 = vunpack.c.l.b16 %v335
      %v484 = vunpack.c.l.b16 %v336
      %v485 = vunpack.c.l.b16 %v337
      %v486 = vunpack.c.l.b16 %v338
      %v487 = vunpack.c.l.b16 %v339
      %v488 = vunpack.c.l.b16 %v340
      %v489 = vunpack.c.l.b16 %v341
      %v490 = vunpack.c.l.b16 %v342
      %v491 = vunpack.c.l.b16 %v343
      %v492 = vunpack.c.l.b16 %v344
      %v493 = vunpack.c.l.b16 %v345
      %v494 = vunpack.c.l.b16 %v346
      %v495 = vpack.c.b16 %v432, %v431
      %v496 = vpack.c.b16 %v434, %v433
      %v497 = vpack.c.b16 %v436, %v435
      %v498 = vpack.c.b16 %v438, %v437
      %v499 = vpack.c.b16 %v440, %v439
      %v500 = vpack.c.b16 %v442, %v441
      %v501 = vpack.c.b16 %v444, %v443
      %v502 = vpack.c.b16 %v446, %v445
      %v503 = vpack.c.b16 %v448, %v447
      %v504 = vpack.c.b16 %v450, %v449
      %v505 = vpack.c.b16 %v452, %v451
      %v506 = vpack.c.b16 %v454, %v453
      %v507 = vpack.c.b16 %v456, %v455
      %v508 = vpack.c.b16 %v458, %v457
      %v509 = vpack.c.b16 %v460, %v459
      %v510 = vpack.c.b16 %v462, %v461
      %v511 = vpack.c.b16 %v464, %v463
      %v512 = vpack.c.b16 %v466, %v465
      %v513 = vpack.c.b16 %v468, %v467
      %v514 = vpack.c.b16 %v470, %v469
      %v515 = vpack.c.b16 %v472, %v471
      %v516 = vpack.c.b16 %v474, %v473
      %v517 = vpack.c.b16 %v476, %v475
      %v518 = vpack.c.b16 %v478, %v477
      %v519 = vpack.c.b16 %v480, %v479
      %v520 = vpack.c.b16 %v482, %v481
      %v521 = vpack.c.b16 %v484, %v483
      %v522 = vpack.c.b16 %v486, %v485
      %v523 = vpack.c.b16 %v488, %v487
      %v524 = vpack.c.b16 %v490, %v489
      %v525 = vpack.c.b16 %v492, %v491
      %v526 = vpack.c.b16 %v494, %v493
      %v575 = vunpack.c.l.b16 %v347
      %v576 = vunpack.c.l.b16 %v348
      %v577 = vunpack.c.l.b16 %v349
      %v578 = vunpack.c.l.b16 %v350
      %v579 = vunpack.c.l.b16 %v351
      %v580 = vunpack.c.l.b16 %v352
      %v581 = vunpack.c.l.b16 %v353
      %v582 = vunpack.c.l.b16 %v354
      %v583 = vunpack.c.l.b16 %v355
      %v584 = vunpack.c.l.b16 %v356
      %v585 = vunpack.c.l.b16 %v357
      %v586 = vunpack.c.l.b16 %v358
      %v587 = vunpack.c.l.b16 %v359
      %v588 = vunpack.c.l.b16 %v360
      %v589 = vunpack.c.l.b16 %v361
      %v590 = vunpack.c.l.b16 %v362
      %v591 = vpack.c.b16 %v576, %v575
      %v592 = vpack.c.b16 %v578, %v577
      %v593 = vpack.c.b16 %v580, %v579
      %v594 = vpack.c.b16 %v582, %v581
      %v595 = vpack.c.b16 %v584, %v583
      %v596 = vpack.c.b16 %v586, %v585
      %v597 = vpack.c.b16 %v588, %v587
      %v598 = vpack.c.b16 %v590, %v589
      %607 = vmatpush.bf16.msra.mxu0 %v598
      %608 = vmatpush.bf16.msra.mxu0 %v597
      %609 = vmatpush.bf16.msra.mxu0 %v596
      %610 = vmatpush.bf16.msra.mxu0 %v595
      %611 = vmatpush.bf16.msra.mxu0 %v594
      %612 = vmatpush.bf16.msra.mxu0 %v593
      %613 = vmatpush.bf16.msra.mxu0 %v592
      %614 = vmatpush.bf16.msra.mxu0 %v591
      %615 = vmatmul.bf16.gmra.mxu0 %v495
      %v616 = vpop.f32.mrf.mxu0
      %v617 = vadd.f32 %v365, %v616
      %v618 = vpop.f32.mrf.mxu0
      %v619 = vadd.f32 %v365, %v618
      %620 = vmatmul.bf16.gmra.mxu0 %v496
      %v621 = vpop.f32.mrf.mxu0
      %v622 = vadd.f32 %v365, %v621
      %v623 = vpop.f32.mrf.mxu0
      %v624 = vadd.f32 %v365, %v623
      %625 = vmatmul.bf16.gmra.mxu0 %v497
      %v626 = vpop.f32.mrf.mxu0
      %v627 = vadd.f32 %v365, %v626
      %v628 = vpop.f32.mrf.mxu0
      %v629 = vadd.f32 %v365, %v628
      %630 = vmatmul.bf16.gmra.mxu0 %v498
      %v631 = vpop.f32.mrf.mxu0
      %v632 = vadd.f32 %v365, %v631
      %v633 = vpop.f32.mrf.mxu0
      %v634 = vadd.f32 %v365, %v633
      %635 = vmatmul.bf16.gmra.mxu0 %v499
      %v636 = vpop.f32.mrf.mxu0
      %v637 = vadd.f32 %v365, %v636
      %v638 = vpop.f32.mrf.mxu0
      %v639 = vadd.f32 %v365, %v638
      %640 = vmatmul.bf16.gmra.mxu0 %v500
      %v641 = vpop.f32.mrf.mxu0
      %v642 = vadd.f32 %v365, %v641
      %v643 = vpop.f32.mrf.mxu0
      %v644 = vadd.f32 %v365, %v643
      %645 = vmatmul.bf16.gmra.mxu0 %v501
      %v646 = vpop.f32.mrf.mxu0
      %v647 = vadd.f32 %v365, %v646
      %v648 = vpop.f32.mrf.mxu0
      %v649 = vadd.f32 %v365, %v648
      %650 = vmatmul.bf16.gmra.mxu0 %v502
      %v651 = vpop.f32.mrf.mxu0
      %v652 = vadd.f32 %v365, %v651
      %v653 = vpop.f32.mrf.mxu0
      %v654 = vadd.f32 %v365, %v653
      %655 = vmatmul.bf16.gmra.mxu0 %v503
      %v656 = vpop.f32.mrf.mxu0
      %v657 = vadd.f32 %v365, %v656
      %v658 = vpop.f32.mrf.mxu0
      %v659 = vadd.f32 %v365, %v658
      %660 = vmatmul.bf16.gmra.mxu0 %v504
      %v661 = vpop.f32.mrf.mxu0
      %v662 = vadd.f32 %v365, %v661
      %v663 = vpop.f32.mrf.mxu0
      %v664 = vadd.f32 %v365, %v663
      %665 = vmatmul.bf16.gmra.mxu0 %v505
      %v666 = vpop.f32.mrf.mxu0
      %v667 = vadd.f32 %v365, %v666
      %v668 = vpop.f32.mrf.mxu0
      %v669 = vadd.f32 %v365, %v668
      %670 = vmatmul.bf16.gmra.mxu0 %v506
      %v671 = vpop.f32.mrf.mxu0
      %v672 = vadd.f32 %v365, %v671
      %v673 = vpop.f32.mrf.mxu0
      %v674 = vadd.f32 %v365, %v673
      %675 = vmatmul.bf16.gmra.mxu0 %v507
      %v676 = vpop.f32.mrf.mxu0
      %v677 = vadd.f32 %v365, %v676
      %v678 = vpop.f32.mrf.mxu0
      %v679 = vadd.f32 %v365, %v678
      %680 = vmatmul.bf16.gmra.mxu0 %v508
      %v681 = vpop.f32.mrf.mxu0
      %v682 = vadd.f32 %v365, %v681
      %v683 = vpop.f32.mrf.mxu0
      %v684 = vadd.f32 %v365, %v683
      %685 = vmatmul.bf16.gmra.mxu0 %v509
      %v686 = vpop.f32.mrf.mxu0
      %v687 = vadd.f32 %v365, %v686
      %v688 = vpop.f32.mrf.mxu0
      %v689 = vadd.f32 %v365, %v688
      %690 = vmatmul.bf16.gmra.mxu0 %v510
      %v691 = vpop.f32.mrf.mxu0
      %v692 = vadd.f32 %v365, %v691
      %v693 = vpop.f32.mrf.mxu0
      %v694 = vadd.f32 %v365, %v693
      %695 = vmatmul.bf16.gmra.mxu0 %v511
      %v696 = vpop.f32.mrf.mxu0
      %v697 = vadd.f32 %v365, %v696
      %v698 = vpop.f32.mrf.mxu0
      %v699 = vadd.f32 %v365, %v698
      %700 = vmatmul.bf16.gmra.mxu0 %v512
      %v701 = vpop.f32.mrf.mxu0
      %v702 = vadd.f32 %v365, %v701
      %v703 = vpop.f32.mrf.mxu0
      %v704 = vadd.f32 %v365, %v703
      %705 = vmatmul.bf16.gmra.mxu0 %v513
      %v706 = vpop.f32.mrf.mxu0
      %v707 = vadd.f32 %v365, %v706
      %v708 = vpop.f32.mrf.mxu0
      %v709 = vadd.f32 %v365, %v708
      %710 = vmatmul.bf16.gmra.mxu0 %v514
      %v711 = vpop.f32.mrf.mxu0
      %v712 = vadd.f32 %v365, %v711
      %v713 = vpop.f32.mrf.mxu0
      %v714 = vadd.f32 %v365, %v713
      %715 = vmatmul.bf16.gmra.mxu0 %v515
      %v716 = vpop.f32.mrf.mxu0
      %v717 = vadd.f32 %v365, %v716
      %v718 = vpop.f32.mrf.mxu0
      %v719 = vadd.f32 %v365, %v718
      %720 = vmatmul.bf16.gmra.mxu0 %v516
      %v721 = vpop.f32.mrf.mxu0
      %v722 = vadd.f32 %v365, %v721
      %v723 = vpop.f32.mrf.mxu0
      %v724 = vadd.f32 %v365, %v723
      %725 = vmatmul.bf16.gmra.mxu0 %v517
      %v726 = vpop.f32.mrf.mxu0
      %v727 = vadd.f32 %v365, %v726
      %v728 = vpop.f32.mrf.mxu0
      %v729 = vadd.f32 %v365, %v728
      %730 = vmatmul.bf16.gmra.mxu0 %v518
      %v731 = vpop.f32.mrf.mxu0
      %v732 = vadd.f32 %v365, %v731
      %v733 = vpop.f32.mrf.mxu0
      %v734 = vadd.f32 %v365, %v733
      %735 = vmatmul.bf16.gmra.mxu0 %v519
      %v736 = vpop.f32.mrf.mxu0
      %v737 = vadd.f32 %v365, %v736
      %v738 = vpop.f32.mrf.mxu0
      %v739 = vadd.f32 %v365, %v738
      %740 = vmatmul.bf16.gmra.mxu0 %v520
      %v741 = vpop.f32.mrf.mxu0
      %v742 = vadd.f32 %v365, %v741
      %v743 = vpop.f32.mrf.mxu0
      %v744 = vadd.f32 %v365, %v743
      %745 = vmatmul.bf16.gmra.mxu0 %v521
      %v746 = vpop.f32.mrf.mxu0
      %v747 = vadd.f32 %v365, %v746
      %v748 = vpop.f32.mrf.mxu0
      %v749 = vadd.f32 %v365, %v748
      %750 = vmatmul.bf16.gmra.mxu0 %v522
      %v751 = vpop.f32.mrf.mxu0
      %v752 = vadd.f32 %v365, %v751
      %v753 = vpop.f32.mrf.mxu0
      %v754 = vadd.f32 %v365, %v753
      %755 = vmatmul.bf16.gmra.mxu0 %v523
      %v756 = vpop.f32.mrf.mxu0
      %v757 = vadd.f32 %v365, %v756
      %v758 = vpop.f32.mrf.mxu0
      %v759 = vadd.f32 %v365, %v758
      %760 = vmatmul.bf16.gmra.mxu0 %v524
      %v761 = vpop.f32.mrf.mxu0
      %v762 = vadd.f32 %v365, %v761
      %v763 = vpop.f32.mrf.mxu0
      %v764 = vadd.f32 %v365, %v763
      %765 = vmatmul.bf16.gmra.mxu0 %v525
      %v766 = vpop.f32.mrf.mxu0
      %v767 = vadd.f32 %v365, %v766
      %v768 = vpop.f32.mrf.mxu0
      %v769 = vadd.f32 %v365, %v768
      %770 = vmatmul.bf16.gmra.mxu0 %v526
      %v771 = vpop.f32.mrf.mxu0
      %v772 = vadd.f32 %v365, %v771
      %v773 = vpop.f32.mrf.mxu0
      %v774 = vadd.f32 %v365, %v773
      %775 = vdwg.mxu0
      %v776 = vmax.f32 %v617, 0.0
      %v777 = vmax.f32 %v619, 0.0
      %v778 = vmax.f32 %v622, 0.0
      %v779 = vmax.f32 %v624, 0.0
      %v780 = vmax.f32 %v627, 0.0
      %v781 = vmax.f32 %v629, 0.0
      %v782 = vmax.f32 %v632, 0.0
      %v783 = vmax.f32 %v634, 0.0
      %v784 = vmax.f32 %v637, 0.0
      %v785 = vmax.f32 %v639, 0.0
      %v786 = vmax.f32 %v642, 0.0
      %v787 = vmax.f32 %v644, 0.0
      %v788 = vmax.f32 %v647, 0.0
      %v789 = vmax.f32 %v649, 0.0
      %v790 = vmax.f32 %v652, 0.0
      %v791 = vmax.f32 %v654, 0.0
      %v792 = vmax.f32 %v657, 0.0
      %v793 = vmax.f32 %v659, 0.0
      %v794 = vmax.f32 %v662, 0.0
      %v795 = vmax.f32 %v664, 0.0
      %v796 = vmax.f32 %v667, 0.0
      %v797 = vmax.f32 %v669, 0.0
      %v798 = vmax.f32 %v672, 0.0
      %v799 = vmax.f32 %v674, 0.0
      %v800 = vmax.f32 %v677, 0.0
      %v801 = vmax.f32 %v679, 0.0
      %v802 = vmax.f32 %v682, 0.0
      %v803 = vmax.f32 %v684, 0.0
      %v804 = vmax.f32 %v687, 0.0
      %v805 = vmax.f32 %v689, 0.0
      %v806 = vmax.f32 %v692, 0.0
      %v807 = vmax.f32 %v694, 0.0
      %v808 = vmax.f32 %v697, 0.0
      %v809 = vmax.f32 %v699, 0.0
      %v810 = vmax.f32 %v702, 0.0
      %v811 = vmax.f32 %v704, 0.0
      %v812 = vmax.f32 %v707, 0.0
      %v813 = vmax.f32 %v709, 0.0
      %v814 = vmax.f32 %v712, 0.0
      %v815 = vmax.f32 %v714, 0.0
      %v816 = vmax.f32 %v717, 0.0
      %v817 = vmax.f32 %v719, 0.0
      %v818 = vmax.f32 %v722, 0.0
      %v819 = vmax.f32 %v724, 0.0
      %v820 = vmax.f32 %v727, 0.0
      %v821 = vmax.f32 %v729, 0.0
      %v822 = vmax.f32 %v732, 0.0
      %v823 = vmax.f32 %v734, 0.0
      %v824 = vmax.f32 %v737, 0.0
      %v825 = vmax.f32 %v739, 0.0
      %v826 = vmax.f32 %v742, 0.0
      %v827 = vmax.f32 %v744, 0.0
      %v828 = vmax.f32 %v747, 0.0
      %v829 = vmax.f32 %v749, 0.0
      %v830 = vmax.f32 %v752, 0.0
      %v831 = vmax.f32 %v754, 0.0
      %v832 = vmax.f32 %v757, 0.0
      %v833 = vmax.f32 %v759, 0.0
      %v834 = vmax.f32 %v762, 0.0
      %v835 = vmax.f32 %v764, 0.0
      %v836 = vmax.f32 %v767, 0.0
      %v837 = vmax.f32 %v769, 0.0
      %v838 = vmax.f32 %v772, 0.0
      %v839 = vmax.f32 %v774, 0.0
      %s840 = smul.u32 %s22, 512
      %v841 = vlaneseq
      %v842 = vand.u32 %v841, 127
      %v843 = vadd.s32 %v842, 128
      %v844 = vadd.s32 %v842, 256
      %v845 = vadd.s32 %v842, 384
      %v846 = vstv %s840
      %v847 = vadd.s32 %v846, %v842
      %v848 = vadd.s32 %v846, %v843
      %v849 = vadd.s32 %v846, %v844
      %v850 = vadd.s32 %v846, %v845
      %v851 = vlaneseq
      %v852 = vshrl.u32 %v851, 7
      %v853 = vmul.u32 %v852, 256
      %vm854 = vcmp.ge.s32.totalorder %v847, %v853
      %vm855 = vcmp.ge.s32.totalorder %v848, %v853
      %vm856 = vcmp.ge.s32.totalorder %v849, %v853
      %vm857 = vcmp.ge.s32.totalorder %v850, %v853
      %v858 = vadd.s32 %v853, 256
      %vm859 = vcmp.lt.s32.totalorder %v847, %v858
      %vm860 = vcmp.lt.s32.totalorder %v848, %v858
      %vm861 = vcmp.lt.s32.totalorder %v849, %v858
      %vm862 = vcmp.lt.s32.totalorder %v850, %v858
      %vm863 = vmand %vm854, %vm859
      %vm864 = vmand %vm855, %vm860
      %vm865 = vmand %vm856, %vm861
      %vm866 = vmand %vm857, %vm862
      %v867 = vsel %vm863, 1, 0
      %v868 = vsel %vm864, 1, 0
      %v869 = vsel %vm865, 1, 0
      %v870 = vsel %vm866, 1, 0
      %v871 = vcvt.s32.f32 %v867
      %v872 = vcvt.s32.f32 %v868
      %v873 = vcvt.s32.f32 %v869
      %v874 = vcvt.s32.f32 %v870
      %v875 = vpack.c.bf16 %v871, %v871
      %v876 = vpack.c.bf16 %v872, %v872
      %v877 = vpack.c.bf16 %v873, %v873
      %v878 = vpack.c.bf16 %v874, %v874
      %v879 = vld [vmem:[#allocation2] sm:$0xff]
      %v880 = vpack.c.bf16 %v777, %v776
      %v881 = vpack.c.bf16 %v779, %v778
      %v882 = vpack.c.bf16 %v781, %v780
      %v883 = vpack.c.bf16 %v783, %v782
      %v884 = vpack.c.bf16 %v785, %v784
      %v885 = vpack.c.bf16 %v787, %v786
      %v886 = vpack.c.bf16 %v789, %v788
      %v887 = vpack.c.bf16 %v791, %v790
      %v888 = vpack.c.bf16 %v793, %v792
      %v889 = vpack.c.bf16 %v795, %v794
      %v890 = vpack.c.bf16 %v797, %v796
      %v891 = vpack.c.bf16 %v799, %v798
      %v892 = vpack.c.bf16 %v801, %v800
      %v893 = vpack.c.bf16 %v803, %v802
      %v894 = vpack.c.bf16 %v805, %v804
      %v895 = vpack.c.bf16 %v807, %v806
      %v896 = vpack.c.bf16 %v809, %v808
      %v897 = vpack.c.bf16 %v811, %v810
      %v898 = vpack.c.bf16 %v813, %v812
      %v899 = vpack.c.bf16 %v815, %v814
      %v900 = vpack.c.bf16 %v817, %v816
      %v901 = vpack.c.bf16 %v819, %v818
      %v902 = vpack.c.bf16 %v821, %v820
      %v903 = vpack.c.bf16 %v823, %v822
      %v904 = vpack.c.bf16 %v825, %v824
      %v905 = vpack.c.bf16 %v827, %v826
      %v906 = vpack.c.bf16 %v829, %v828
      %v907 = vpack.c.bf16 %v831, %v830
      %v908 = vpack.c.bf16 %v833, %v832
      %v909 = vpack.c.bf16 %v835, %v834
      %v910 = vpack.c.bf16 %v837, %v836
      %v911 = vpack.c.bf16 %v839, %v838
      %912 = vmatpush.bf16.msra.mxu0 %v887
      %913 = vmatpush.bf16.msra.mxu0 %v886
      %914 = vmatpush.bf16.msra.mxu0 %v885
      %915 = vmatpush.bf16.msra.mxu0 %v884
      %916 = vmatpush.bf16.msra.mxu0 %v883
      %917 = vmatpush.bf16.msra.mxu0 %v882
      %918 = vmatpush.bf16.msra.mxu0 %v881
      %919 = vmatpush.bf16.msra.mxu0 %v880
      %920 = vmatmul.bf16.gmra.mxu0 %v875
      %v921 = vpop.f32.mrf.mxu0
      %v922 = vadd.f32 0.0, %v921
      %v923 = vpop.f32.mrf.mxu0
      %924 = vdwg.mxu0
      %925 = vmatpush.bf16.msra.mxu0 %v895
      %926 = vmatpush.bf16.msra.mxu0 %v894
      %927 = vmatpush.bf16.msra.mxu0 %v893
      %928 = vmatpush.bf16.msra.mxu0 %v892
      %929 = vmatpush.bf16.msra.mxu0 %v891
      %930 = vmatpush.bf16.msra.mxu0 %v890
      %931 = vmatpush.bf16.msra.mxu0 %v889
      %932 = vmatpush.bf16.msra.mxu0 %v888
      %933 = vmatmul.bf16.gmra.mxu0 %v876
      %v934 = vpop.f32.mrf.mxu0
      %v935 = vadd.f32 %v922, %v934
      %v936 = vpop.f32.mrf.mxu0
      %937 = vdwg.mxu0
      %938 = vmatpush.bf16.msra.mxu0 %v903
      %939 = vmatpush.bf16.msra.mxu0 %v902
      %940 = vmatpush.bf16.msra.mxu0 %v901
      %941 = vmatpush.bf16.msra.mxu0 %v900
      %942 = vmatpush.bf16.msra.mxu0 %v899
      %943 = vmatpush.bf16.msra.mxu0 %v898
      %944 = vmatpush.bf16.msra.mxu0 %v897
      %945 = vmatpush.bf16.msra.mxu0 %v896
      %946 = vmatmul.bf16.gmra.mxu0 %v877
      %v947 = vpop.f32.mrf.mxu0
      %v948 = vadd.f32 %v935, %v947
      %v949 = vpop.f32.mrf.mxu0
      %950 = vdwg.mxu0
      %951 = vmatpush.bf16.msra.mxu0 %v911
      %952 = vmatpush.bf16.msra.mxu0 %v910
      %953 = vmatpush.bf16.msra.mxu0 %v909
      %954 = vmatpush.bf16.msra.mxu0 %v908
      %955 = vmatpush.bf16.msra.mxu0 %v907
      %956 = vmatpush.bf16.msra.mxu0 %v906
      %957 = vmatpush.bf16.msra.mxu0 %v905
      %958 = vmatpush.bf16.msra.mxu0 %v904
      %959 = vmatmul.bf16.gmra.mxu0 %v878
      %v960 = vpop.f32.mrf.mxu0
      %v961 = vadd.f32 %v948, %v960
      %v962 = vpop.f32.mrf.mxu0
      %963 = vdwg.mxu0
      %v964 = vadd.f32 %v879, %v961
      %965 = vst [vmem:[#allocation2] sm:$0xff] %v964
      %p966 = scmp.eq.s32.totalorder %s22, 3
      // Predicated region
      $region49: #{patch_embedding_forward.1} parent=43 // pred_check
        %p967 = pneg %p966
      $region50: #{patch_embedding_forward.1} parent=43 // pred_check_branch
        %969 = sbr.rel (%p967) target = $region52
      $region51: #{patch_embedding_forward.1} parent=43 // pred_region
        %v970 = vld [vmem:[#allocation2] sm:$0xff]
        %v971 = vmul.f32 %v970, 0.00390625
        %v972 = vpack.c.bf16 %v971, %v971
        %v973 = vld [vmem:[%s3] sm:$0xf]
        %v974 = vld [vmem:[%s3 + $0x4] sm:$0xf]
        %v975 = vld [vmem:[%s3 + $0x8] sm:$0xf]
        %v976 = vld [vmem:[%s3 + $0xc] sm:$0xf]
        %v977 = vld [vmem:[%s3 + $0x10] sm:$0xf]
        %v978 = vld [vmem:[%s3 + $0x14] sm:$0xf]
        %v979 = vld [vmem:[%s3 + $0x18] sm:$0xf]
        %v980 = vld [vmem:[%s3 + $0x1c] sm:$0xf]
        %v981 = vld [vmem:[%s3 + $0x20] sm:$0xf]
        %v982 = vld [vmem:[%s3 + $0x24] sm:$0xf]
        %v983 = vld [vmem:[%s3 + $0x28] sm:$0xf]
        %v984 = vld [vmem:[%s3 + $0x2c] sm:$0xf]
        %v985 = vld [vmem:[%s3 + $0x30] sm:$0xf]
        %v986 = vld [vmem:[%s3 + $0x34] sm:$0xf]
        %v987 = vld [vmem:[%s3 + $0x38] sm:$0xf]
        %v988 = vld [vmem:[%s3 + $0x3c] sm:$0xf]
        %v989 = vld [vmem:[%s4] sm:$0x1]
        %v991 = vperm.slane %v989, 0
        %v1009 = vunpack.c.l.b16 %v973
        %v1010 = vunpack.c.l.b16 %v974
        %v1011 = vunpack.c.l.b16 %v975
        %v1012 = vunpack.c.l.b16 %v976
        %v1013 = vunpack.c.l.b16 %v977
        %v1014 = vunpack.c.l.b16 %v978
        %v1015 = vunpack.c.l.b16 %v979
        %v1016 = vunpack.c.l.b16 %v980
        %v1017 = vunpack.c.l.b16 %v981
        %v1018 = vunpack.c.l.b16 %v982
        %v1019 = vunpack.c.l.b16 %v983
        %v1020 = vunpack.c.l.b16 %v984
        %v1021 = vunpack.c.l.b16 %v985
        %v1022 = vunpack.c.l.b16 %v986
        %v1023 = vunpack.c.l.b16 %v987
        %v1024 = vunpack.c.l.b16 %v988
        %v1025 = vpack.c.b16 %v1010, %v1009
        %v1026 = vpack.c.b16 %v1012, %v1011
        %v1027 = vpack.c.b16 %v1014, %v1013
        %v1028 = vpack.c.b16 %v1016, %v1015
        %v1029 = vpack.c.b16 %v1018, %v1017
        %v1030 = vpack.c.b16 %v1020, %v1019
        %v1031 = vpack.c.b16 %v1022, %v1021
        %v1032 = vpack.c.b16 %v1024, %v1023
        %1041 = vmatpush.bf16.msra.mxu0 %v1032
        %1042 = vmatpush.bf16.msra.mxu0 %v1031
        %1043 = vmatpush.bf16.msra.mxu0 %v1030
        %1044 = vmatpush.bf16.msra.mxu0 %v1029
        %1045 = vmatpush.bf16.msra.mxu0 %v1028
        %1046 = vmatpush.bf16.msra.mxu0 %v1027
        %1047 = vmatpush.bf16.msra.mxu0 %v1026
        %1048 = vmatpush.bf16.msra.mxu0 %v1025
        %1049 = vmatmul.bf16.gmra.mxu0 %v972
        %v1050 = vpop.f32.mrf.mxu0
        %v1051 = vadd.f32 %v991, %v1050
        %v1052 = vpop.f32.mrf.mxu0
        %1053 = vdwg.mxu0
        %v1054 = vld [vmem:[%s5] sm:$0xff]
        %v1055 = vadd.f32 %v1051, %v1054
        %1056 = vst [vmem:[%s277] sm:$0xff] %v1055
      $region52: #{patch_embedding_forward.1} parent=43 // pred_fallthru
        _
      %p1057 = scmp.lt.s32.totalorder %s21, 1
      %s1058 = scalar_select %p1057, %s21, 1
      %s1059 = smul.addr %s1058, 8
      %s1060 = scalar_lea.vmem %s6, %s1059
      // Predicated region
      $region53: #{patch_embedding_forward.1} parent=43 // pred_check
        %p1061 = pneg %p182
      $region54: #{patch_embedding_forward.1} parent=43 // pred_check_branch
        %1063 = sbr.rel (%p1061) target = $region56
      $region55: #{patch_embedding_forward.1} parent=43 // pred_region
        _
      $region56: #{patch_embedding_forward.1} parent=43 // pred_fallthru
        _
    $region44: #{patch_embedding_forward.1} parent=5 // pred_fallthru
      _
    %p1064 = scmp.le.s32.totalorder 2, %s12
    // Predicated region
    $region57: #{patch_embedding_forward.1} parent=5 // pred_check
      %p1065 = pneg %p1064
    $region58: #{patch_embedding_forward.1} parent=5 // pred_check_branch
      %1067 = sbr.rel (%p1065) target = $region60
    $region59: #{patch_embedding_forward.1} parent=5 // pred_region
      %s1068 = ssub.s32 %s12, 2
      // Predicated region
      $region61: #{patch_embedding_forward.1} parent=59 // pred_check
        %p1069 = pneg %p188
      $region62: #{patch_embedding_forward.1} parent=59 // pred_check_branch
        %1071 = sbr.rel (%p1069) target = $region64
      $region63: #{patch_embedding_forward.1} parent=59 // pred_region
        %p1072 = scmp.lt.s32.totalorder %s23, 1
        %s1073 = scalar_select %p1072, %s23, 1
        %s1074 = smul.addr %s1073, 8
        %s1075 = scalar_lea.vmem %s6, %s1074
      $region64: #{patch_embedding_forward.1} parent=59 // pred_fallthru
        _
    $region60: #{patch_embedding_forward.1} parent=5 // pred_fallthru
      _
  $region6: #{patch_embedding_forward.1} parent=0 // loop_footer
    %s16 = sadd.s32 1, %s12
  $region7: #{patch_embedding_forward.1} parent=0 // loop_footer_branch
    %11 = sbr.rel target = $region3
  $region8: #{patch_embedding_forward.1} parent=0 // loop_exit
    _

</llo_original>
